<compile_context>
chip_gen: v5e
topology: v5e:2x2
jax: 0.10.0
libtpu: 0.0.40
codegen_flags: <defaults>
</compile_context>

<pallas_src>
import functools

import jax
import jax.numpy as jnp
from jax.experimental import pallas as pl
from jax.experimental.pallas import tpu as pltpu

sentence = ("   if you want to build a ship, don't drum up poeple together to "
            "collect wood and don't assign them tasks and work, but rather teach "
            "them to long for the endless immensity of the sea.")
char_set = list(set(sentence))
char_dict = {c: i for i, c in enumerate(char_set)}
N_CHARS = len(char_dict)


def _round_up(x, m):
    return ((x + m - 1) // m) * m


def _pad2(a, rows, cols):
    return jnp.pad(a, ((0, rows - a.shape[0]), (0, cols - a.shape[1])))


# ----------------------------------------------------------------------------- kernel
def rnn_fc_kernel(num_layers, seq_len, batch, x_ref, *refs):
    """Refs (all VMEM, lane/sublane padded):
      x_ref:      (T*Bp, In_p)     time-major flattened input
      layer 0:    w_ih0 (In_p,Hp), w_hh0 (Hp,Hp), b0 (1,Hp)
      layer l>=1: w_cat_l (2*Hp,Hp) = vstack(W_ih_l, W_hh_l), b_l (1,Hp)
      head:       w_fc (Hp,Op), b_fc (1,Op)
      out_ref:    (T*Bp, Op)
    """
    w_ih0_ref, w_hh0_ref, b0_ref = refs[0], refs[1], refs[2]
    cat_refs = []
    idx = 3
    for _ in range(1, num_layers):
        cat_refs.append((refs[idx], refs[idx + 1]))
        idx += 2
    w_fc_ref, b_fc_ref, out_ref = refs[idx], refs[idx + 1], refs[idx + 2]

    hidden = w_hh0_ref.shape[1]
    cdtype = w_hh0_ref.dtype          # MXU operand dtype (f32 or bf16)

    # ---- Layer 0: hoisted input projection for ALL timesteps (one MXU pass),
    #      kept as a value in vregs (no scratch round-trip).
    proj0 = (jnp.dot(x_ref[...], w_ih0_ref[...],
                     preferred_element_type=jnp.float32) + b0_ref[...])

    # ---- Wavefront over (layer, time) diagonals l + t = d.
    #      Each level reads only the previous level's states -> the pushes
    #      within a level are independent and can overlap on the MXU.
    h_prev = [jnp.zeros((batch, hidden), jnp.float32) for _ in range(num_layers)]
    top_outs = [None] * seq_len

    for d in range(seq_len + num_layers - 1):
        prev = list(h_prev)           # snapshot of level d-1 states
        for l in range(num_layers):
            t = d - l
            if t < 0 or t >= seq_len:
                continue
            if l == 0:
                p_t = proj0[t * batch:(t + 1) * batch, :]        # static, 8-aligned
                z = p_t + jnp.dot(prev[0].astype(cdtype), w_hh0_ref[...],
                                  preferred_element_type=jnp.float32)
            else:
                w_cat_ref, b_ref = cat_refs[l - 1]
                # Fused input+recurrent contraction: one 2*Hp-deep MXU push.
                xcat = jnp.concatenate([prev[l - 1], prev[l]], axis=1)
                z = (jnp.dot(xcat.astype(cdtype), w_cat_ref[...],
                             preferred_element_type=jnp.float32) + b_ref[...])
            h_new = jnp.tanh(z)                                   # f32 on VPU/EUP
            h_prev[l] = h_new
            if l == num_layers - 1:
                top_outs[t] = h_new

    # ---- Linear head: one lane-dense matmul on the top-layer sequence.
    seq_top = jnp.concatenate(top_outs, axis=0)                   # (T*Bp, Hp)
    out_ref[...] = (jnp.dot(seq_top.astype(cdtype), w_fc_ref[...],
                            preferred_element_type=jnp.float32) + b_fc_ref[...])


# ----------------------------------------------------------------------------- wrapper
def long_sequence_forward(x, params, *, use_bf16_matmul=False):
    """x: (B, T, input_dim) float32 -> (B, T, n_chars) float32."""
    num_layers = len(params["w_hh"])
    B, T, In = x.shape
    H = params["w_hh"][0].shape[0]
    O = params["w_fc"].shape[1]

    # Pad to TPU-friendly shapes: sublanes (8) on batch, lanes (128) on features.
    Bp = _round_up(max(B, 8), 8)
    Inp = _round_up(In, 128)
    Hp = _round_up(H, 128)
    Op = _round_up(O, 128)

    mdtype = jnp.bfloat16 if use_bf16_matmul else jnp.float32

    # Time-major, batch/lane padded, flattened to a lane-dense 2-D slab.
    xt = jnp.transpose(x.astype(jnp.float32), (1, 0, 2))          # (T, B, In)
    xt = jnp.pad(xt, ((0, 0), (0, Bp - B), (0, Inp - In)))        # (T, Bp, Inp)
    x2d = xt.reshape(T * Bp, Inp).astype(mdtype)

    flat = []
    # Layer 0: separate W_ih / W_hh (projection is hoisted in the kernel).
    flat.append(_pad2(params["w_ih"][0].astype(jnp.float32), Inp, Hp).astype(mdtype))
    flat.append(_pad2(params["w_hh"][0].astype(jnp.float32), Hp, Hp).astype(mdtype))
    flat.append(_pad2(params["b"][0].astype(jnp.float32), 1, Hp))
    # Layers >=1: fused [W_ih ; W_hh] contraction weights.
    for l in range(1, num_layers):
        w_ih = _pad2(params["w_ih"][l].astype(jnp.float32), Hp, Hp)
        w_hh = _pad2(params["w_hh"][l].astype(jnp.float32), Hp, Hp)
        flat.append(jnp.concatenate([w_ih, w_hh], axis=0).astype(mdtype))  # (2*Hp,Hp)
        flat.append(_pad2(params["b"][l].astype(jnp.float32), 1, Hp))
    flat.append(_pad2(params["w_fc"].astype(jnp.float32), Hp, Op).astype(mdtype))
    flat.append(_pad2(params["b_fc"].astype(jnp.float32), 1, Op))
    n_in = 1 + len(flat)

    # Advisory cost estimate for the XLA scheduler.
    flops = 2 * T * Bp * Inp * Hp + 2 * T * Bp * Hp * Hp          # layer 0
    flops += (num_layers - 1) * 2 * T * Bp * (2 * Hp) * Hp        # fused layers
    flops += 2 * T * Bp * Hp * Op                                 # FC head
    bytes_accessed = int(sum(int(a.size) * a.dtype.itemsize for a in [x2d] + flat)
                         + 4 * T * Bp * Op)
    cost = pl.CostEstimate(flops=flops,
                           transcendentals=num_layers * T * Bp * Hp,
                           bytes_accessed=bytes_accessed)

    out2d = pl.pallas_call(
        functools.partial(rnn_fc_kernel, num_layers, T, Bp),
        out_shape=jax.ShapeDtypeStruct((T * Bp, Op), jnp.float32),
        in_specs=[pl.BlockSpec(memory_space=pltpu.MemorySpace.VMEM)] * n_in,
        out_specs=pl.BlockSpec(memory_space=pltpu.MemorySpace.VMEM),
        compiler_params=pltpu.CompilerParams(vmem_limit_bytes=32 * 1024 * 1024),
        cost_estimate=cost,
    )(x2d, *flat)

    # Drop padding and restore (B, T, O) batch-first layout (wrapper-side plumbing).
    out = out2d.reshape(T, Bp, Op)[:, :B, :O]
    return jnp.transpose(out, (1, 0, 2))


# ----------------------------------------------------------------------------- params
def init_params(key, input_dim, hidden_dim, num_layers, out_dim):
    """Deterministic init matching PyTorch nn.RNN / nn.Linear parameter shapes.
    Weights stored pre-transposed for x @ W, and b_ih + b_hh combined."""
    k = 1.0 / jnp.sqrt(hidden_dim)
    params = {"w_ih": [], "w_hh": [], "b": []}
    for l in range(num_layers):
        in_l = input_dim if l == 0 else hidden_dim
        key, k1, k2, k3, k4 = jax.random.split(key, 5)
        w_ih = jax.random.uniform(k1, (hidden_dim, in_l), jnp.float32, -k, k)
        w_hh = jax.random.uniform(k2, (hidden_dim, hidden_dim), jnp.float32, -k, k)
        b_ih = jax.random.uniform(k3, (hidden_dim,), jnp.float32, -k, k)
        b_hh = jax.random.uniform(k4, (hidden_dim,), jnp.float32, -k, k)
        params["w_ih"].append(w_ih.T)                        # (in_l, H)
        params["w_hh"].append(w_hh.T)                        # (H, H)
        params["b"].append((b_ih + b_hh).reshape(1, hidden_dim))
    key, k5, k6 = jax.random.split(key, 3)
    w_fc = jax.random.uniform(k5, (out_dim, hidden_dim), jnp.float32, -k, k)
    b_fc = jax.random.uniform(k6, (out_dim,), jnp.float32, -k, k)
    params["w_fc"] = w_fc.T                                  # (H, O)
    params["b_fc"] = b_fc.reshape(1, out_dim)
    return params


# ----------------------------------------------------------------------------- reference
def reference_forward(x, params):
    num_layers = len(params["w_hh"])
    B, T, _ = x.shape
    H = params["w_hh"][0].shape[0]
    seq = x.astype(jnp.float32)
    for l in range(num_layers):
        h = jnp.zeros((B, H), jnp.float32)
        outs = []
        for t in range(T):
            h = jnp.tanh(seq[:, t, :] @ params["w_ih"][l]
                         + h @ params["w_hh"][l]
                         + params["b"][l])
            outs.append(h)
        seq = jnp.stack(outs, axis=1)                        # (B, T, H)
    return seq @ params["w_fc"] + params["b_fc"]


# ----------------------------------------------------------------------------- main
if __name__ == "__main__":
    B, T = 2, 8
    input_dim = N_CHARS      # one-hot-sized input, as in the char-RNN tutorial
    hidden_dim = 32
    num_layers = 2

    key = jax.random.PRNGKey(0)
    key, kx = jax.random.split(key)
    x = jax.random.normal(kx, (B, T, input_dim), jnp.float32)

    params = init_params(key, input_dim, hidden_dim, num_layers, N_CHARS)

    out = long_sequence_forward(x, params)      # f32 MXU path (tight tolerance)
    out = jax.block_until_ready(out)

    ref = reference_forward(x, params)
    assert out.shape == (B, T, N_CHARS), out.shape
    assert jnp.allclose(out, ref, atol=2e-3, rtol=2e-3), (
        float(jnp.max(jnp.abs(out - ref))))

    print("KERNEL_OK")
</pallas_src>

<mosaic_0001>
module attributes {stable_mosaic.version = 11 : i64} {
  func.func @rnn_fc_kernel(%arg0: memref<64x128xf32, #tpu.memory_space<vmem>>, %arg1: memref<128x128xf32, #tpu.memory_space<vmem>>, %arg2: memref<128x128xf32, #tpu.memory_space<vmem>>, %arg3: memref<1x128xf32, #tpu.memory_space<vmem>>, %arg4: memref<256x128xf32, #tpu.memory_space<vmem>>, %arg5: memref<1x128xf32, #tpu.memory_space<vmem>>, %arg6: memref<128x128xf32, #tpu.memory_space<vmem>>, %arg7: memref<1x128xf32, #tpu.memory_space<vmem>>, %arg8: memref<64x128xf32, #tpu.memory_space<vmem>>) attributes {dimension_semantics = [], scalar_prefetch = 0 : i64, scratch_operands = 0 : i64, tpu.core_type = #tpu.core_type<tc>} {
    %c0 = arith.constant 0 : index
    %c0_0 = arith.constant 0 : index
    %0 = vector.load %arg0[%c0, %c0_0] : memref<64x128xf32, #tpu.memory_space<vmem>>, vector<64x128xf32>
    %c0_1 = arith.constant 0 : index
    %c0_2 = arith.constant 0 : index
    %1 = vector.load %arg1[%c0_1, %c0_2] : memref<128x128xf32, #tpu.memory_space<vmem>>, vector<128x128xf32>
    %cst = arith.constant dense<0.000000e+00> : vector<64x128xf32>
    %2 = tpu.matmul %0, %1, %cst {dimension_numbers = #tpu.dot_dimension_numbers<[1], [0], [0], [1], [0, 0, 1, 1], [], []>} : vector<64x128xf32>, vector<128x128xf32>, vector<64x128xf32> -> vector<64x128xf32>
    %c0_3 = arith.constant 0 : index
    %c0_4 = arith.constant 0 : index
    %3 = vector.load %arg3[%c0_3, %c0_4] : memref<1x128xf32, #tpu.memory_space<vmem>>, vector<1x128xf32>
    %4 = vector.broadcast %3 : vector<1x128xf32> to vector<64x128xf32>
    %5 = arith.addf %2, %4 : vector<64x128xf32>
    %cst_5 = arith.constant 0.000000e+00 : f32
    %6 = vector.broadcast %cst_5 : f32 to vector<8x128xf32>
    %cst_6 = arith.constant 0.000000e+00 : f32
    %7 = vector.broadcast %cst_6 : f32 to vector<8x128xf32>
    %8 = vector.extract_strided_slice %5 {offsets = [0, 0], sizes = [8, 128], strides = [1, 1]} : vector<64x128xf32> to vector<8x128xf32>
    %c0_7 = arith.constant 0 : index
    %c0_8 = arith.constant 0 : index
    %9 = vector.load %arg2[%c0_7, %c0_8] : memref<128x128xf32, #tpu.memory_space<vmem>>, vector<128x128xf32>
    %cst_9 = arith.constant dense<0.000000e+00> : vector<8x128xf32>
    %10 = tpu.matmul %6, %9, %cst_9 {dimension_numbers = #tpu.dot_dimension_numbers<[1], [0], [0], [1], [0, 0, 1, 1], [], []>} : vector<8x128xf32>, vector<128x128xf32>, vector<8x128xf32> -> vector<8x128xf32>
    %11 = arith.addf %8, %10 : vector<8x128xf32>
    %12 = math.tanh %11 : vector<8x128xf32>
    %13 = vector.extract_strided_slice %5 {offsets = [8, 0], sizes = [8, 128], strides = [1, 1]} : vector<64x128xf32> to vector<8x128xf32>
    %c0_10 = arith.constant 0 : index
    %c0_11 = arith.constant 0 : index
    %14 = vector.load %arg2[%c0_10, %c0_11] : memref<128x128xf32, #tpu.memory_space<vmem>>, vector<128x128xf32>
    %cst_12 = arith.constant dense<0.000000e+00> : vector<8x128xf32>
    %15 = tpu.matmul %12, %14, %cst_12 {dimension_numbers = #tpu.dot_dimension_numbers<[1], [0], [0], [1], [0, 0, 1, 1], [], []>} : vector<8x128xf32>, vector<128x128xf32>, vector<8x128xf32> -> vector<8x128xf32>
    %16 = arith.addf %13, %15 : vector<8x128xf32>
    %17 = math.tanh %16 : vector<8x128xf32>
    %18 = tpu.concatenate %12, %7 in 1 : vector<8x128xf32>, vector<8x128xf32> -> vector<8x256xf32>
    %c0_13 = arith.constant 0 : index
    %c0_14 = arith.constant 0 : index
    %19 = vector.load %arg4[%c0_13, %c0_14] : memref<256x128xf32, #tpu.memory_space<vmem>>, vector<256x128xf32>
    %cst_15 = arith.constant dense<0.000000e+00> : vector<8x128xf32>
    %20 = tpu.matmul %18, %19, %cst_15 {dimension_numbers = #tpu.dot_dimension_numbers<[1], [0], [0], [1], [0, 0, 1, 1], [], []>} : vector<8x256xf32>, vector<256x128xf32>, vector<8x128xf32> -> vector<8x128xf32>
    %c0_16 = arith.constant 0 : index
    %c0_17 = arith.constant 0 : index
    %21 = vector.load %arg5[%c0_16, %c0_17] : memref<1x128xf32, #tpu.memory_space<vmem>>, vector<1x128xf32>
    %22 = vector.broadcast %21 : vector<1x128xf32> to vector<8x128xf32>
    %23 = arith.addf %20, %22 : vector<8x128xf32>
    %24 = math.tanh %23 : vector<8x128xf32>
    %25 = vector.extract_strided_slice %5 {offsets = [16, 0], sizes = [8, 128], strides = [1, 1]} : vector<64x128xf32> to vector<8x128xf32>
    %c0_18 = arith.constant 0 : index
    %c0_19 = arith.constant 0 : index
    %26 = vector.load %arg2[%c0_18, %c0_19] : memref<128x128xf32, #tpu.memory_space<vmem>>, vector<128x128xf32>
    %cst_20 = arith.constant dense<0.000000e+00> : vector<8x128xf32>
    %27 = tpu.matmul %17, %26, %cst_20 {dimension_numbers = #tpu.dot_dimension_numbers<[1], [0], [0], [1], [0, 0, 1, 1], [], []>} : vector<8x128xf32>, vector<128x128xf32>, vector<8x128xf32> -> vector<8x128xf32>
    %28 = arith.addf %25, %27 : vector<8x128xf32>
    %29 = math.tanh %28 : vector<8x128xf32>
    %30 = tpu.concatenate %17, %24 in 1 : vector<8x128xf32>, vector<8x128xf32> -> vector<8x256xf32>
    %c0_21 = arith.constant 0 : index
    %c0_22 = arith.constant 0 : index
    %31 = vector.load %arg4[%c0_21, %c0_22] : memref<256x128xf32, #tpu.memory_space<vmem>>, vector<256x128xf32>
    %cst_23 = arith.constant dense<0.000000e+00> : vector<8x128xf32>
    %32 = tpu.matmul %30, %31, %cst_23 {dimension_numbers = #tpu.dot_dimension_numbers<[1], [0], [0], [1], [0, 0, 1, 1], [], []>} : vector<8x256xf32>, vector<256x128xf32>, vector<8x128xf32> -> vector<8x128xf32>
    %c0_24 = arith.constant 0 : index
    %c0_25 = arith.constant 0 : index
    %33 = vector.load %arg5[%c0_24, %c0_25] : memref<1x128xf32, #tpu.memory_space<vmem>>, vector<1x128xf32>
    %34 = vector.broadcast %33 : vector<1x128xf32> to vector<8x128xf32>
    %35 = arith.addf %32, %34 : vector<8x128xf32>
    %36 = math.tanh %35 : vector<8x128xf32>
    %37 = vector.extract_strided_slice %5 {offsets = [24, 0], sizes = [8, 128], strides = [1, 1]} : vector<64x128xf32> to vector<8x128xf32>
    %c0_26 = arith.constant 0 : index
    %c0_27 = arith.constant 0 : index
    %38 = vector.load %arg2[%c0_26, %c0_27] : memref<128x128xf32, #tpu.memory_space<vmem>>, vector<128x128xf32>
    %cst_28 = arith.constant dense<0.000000e+00> : vector<8x128xf32>
    %39 = tpu.matmul %29, %38, %cst_28 {dimension_numbers = #tpu.dot_dimension_numbers<[1], [0], [0], [1], [0, 0, 1, 1], [], []>} : vector<8x128xf32>, vector<128x128xf32>, vector<8x128xf32> -> vector<8x128xf32>
    %40 = arith.addf %37, %39 : vector<8x128xf32>
    %41 = math.tanh %40 : vector<8x128xf32>
    %42 = tpu.concatenate %29, %36 in 1 : vector<8x128xf32>, vector<8x128xf32> -> vector<8x256xf32>
    %c0_29 = arith.constant 0 : index
    %c0_30 = arith.constant 0 : index
    %43 = vector.load %arg4[%c0_29, %c0_30] : memref<256x128xf32, #tpu.memory_space<vmem>>, vector<256x128xf32>
    %cst_31 = arith.constant dense<0.000000e+00> : vector<8x128xf32>
    %44 = tpu.matmul %42, %43, %cst_31 {dimension_numbers = #tpu.dot_dimension_numbers<[1], [0], [0], [1], [0, 0, 1, 1], [], []>} : vector<8x256xf32>, vector<256x128xf32>, vector<8x128xf32> -> vector<8x128xf32>
    %c0_32 = arith.constant 0 : index
    %c0_33 = arith.constant 0 : index
    %45 = vector.load %arg5[%c0_32, %c0_33] : memref<1x128xf32, #tpu.memory_space<vmem>>, vector<1x128xf32>
    %46 = vector.broadcast %45 : vector<1x128xf32> to vector<8x128xf32>
    %47 = arith.addf %44, %46 : vector<8x128xf32>
    %48 = math.tanh %47 : vector<8x128xf32>
    %49 = vector.extract_strided_slice %5 {offsets = [32, 0], sizes = [8, 128], strides = [1, 1]} : vector<64x128xf32> to vector<8x128xf32>
    %c0_34 = arith.constant 0 : index
    %c0_35 = arith.constant 0 : index
    %50 = vector.load %arg2[%c0_34, %c0_35] : memref<128x128xf32, #tpu.memory_space<vmem>>, vector<128x128xf32>
    %cst_36 = arith.constant dense<0.000000e+00> : vector<8x128xf32>
    %51 = tpu.matmul %41, %50, %cst_36 {dimension_numbers = #tpu.dot_dimension_numbers<[1], [0], [0], [1], [0, 0, 1, 1], [], []>} : vector<8x128xf32>, vector<128x128xf32>, vector<8x128xf32> -> vector<8x128xf32>
    %52 = arith.addf %49, %51 : vector<8x128xf32>
    %53 = math.tanh %52 : vector<8x128xf32>
    %54 = tpu.concatenate %41, %48 in 1 : vector<8x128xf32>, vector<8x128xf32> -> vector<8x256xf32>
    %c0_37 = arith.constant 0 : index
    %c0_38 = arith.constant 0 : index
    %55 = vector.load %arg4[%c0_37, %c0_38] : memref<256x128xf32, #tpu.memory_space<vmem>>, vector<256x128xf32>
    %cst_39 = arith.constant dense<0.000000e+00> : vector<8x128xf32>
    %56 = tpu.matmul %54, %55, %cst_39 {dimension_numbers = #tpu.dot_dimension_numbers<[1], [0], [0], [1], [0, 0, 1, 1], [], []>} : vector<8x256xf32>, vector<256x128xf32>, vector<8x128xf32> -> vector<8x128xf32>
    %c0_40 = arith.constant 0 : index
    %c0_41 = arith.constant 0 : index
    %57 = vector.load %arg5[%c0_40, %c0_41] : memref<1x128xf32, #tpu.memory_space<vmem>>, vector<1x128xf32>
    %58 = vector.broadcast %57 : vector<1x128xf32> to vector<8x128xf32>
    %59 = arith.addf %56, %58 : vector<8x128xf32>
    %60 = math.tanh %59 : vector<8x128xf32>
    %61 = vector.extract_strided_slice %5 {offsets = [40, 0], sizes = [8, 128], strides = [1, 1]} : vector<64x128xf32> to vector<8x128xf32>
    %c0_42 = arith.constant 0 : index
    %c0_43 = arith.constant 0 : index
    %62 = vector.load %arg2[%c0_42, %c0_43] : memref<128x128xf32, #tpu.memory_space<vmem>>, vector<128x128xf32>
    %cst_44 = arith.constant dense<0.000000e+00> : vector<8x128xf32>
    %63 = tpu.matmul %53, %62, %cst_44 {dimension_numbers = #tpu.dot_dimension_numbers<[1], [0], [0], [1], [0, 0, 1, 1], [], []>} : vector<8x128xf32>, vector<128x128xf32>, vector<8x128xf32> -> vector<8x128xf32>
    %64 = arith.addf %61, %63 : vector<8x128xf32>
    %65 = math.tanh %64 : vector<8x128xf32>
    %66 = tpu.concatenate %53, %60 in 1 : vector<8x128xf32>, vector<8x128xf32> -> vector<8x256xf32>
    %c0_45 = arith.constant 0 : index
    %c0_46 = arith.constant 0 : index
    %67 = vector.load %arg4[%c0_45, %c0_46] : memref<256x128xf32, #tpu.memory_space<vmem>>, vector<256x128xf32>
    %cst_47 = arith.constant dense<0.000000e+00> : vector<8x128xf32>
    %68 = tpu.matmul %66, %67, %cst_47 {dimension_numbers = #tpu.dot_dimension_numbers<[1], [0], [0], [1], [0, 0, 1, 1], [], []>} : vector<8x256xf32>, vector<256x128xf32>, vector<8x128xf32> -> vector<8x128xf32>
    %c0_48 = arith.constant 0 : index
    %c0_49 = arith.constant 0 : index
    %69 = vector.load %arg5[%c0_48, %c0_49] : memref<1x128xf32, #tpu.memory_space<vmem>>, vector<1x128xf32>
    %70 = vector.broadcast %69 : vector<1x128xf32> to vector<8x128xf32>
    %71 = arith.addf %68, %70 : vector<8x128xf32>
    %72 = math.tanh %71 : vector<8x128xf32>
    %73 = vector.extract_strided_slice %5 {offsets = [48, 0], sizes = [8, 128], strides = [1, 1]} : vector<64x128xf32> to vector<8x128xf32>
    %c0_50 = arith.constant 0 : index
    %c0_51 = arith.constant 0 : index
    %74 = vector.load %arg2[%c0_50, %c0_51] : memref<128x128xf32, #tpu.memory_space<vmem>>, vector<128x128xf32>
    %cst_52 = arith.constant dense<0.000000e+00> : vector<8x128xf32>
    %75 = tpu.matmul %65, %74, %cst_52 {dimension_numbers = #tpu.dot_dimension_numbers<[1], [0], [0], [1], [0, 0, 1, 1], [], []>} : vector<8x128xf32>, vector<128x128xf32>, vector<8x128xf32> -> vector<8x128xf32>
    %76 = arith.addf %73, %75 : vector<8x128xf32>
    %77 = math.tanh %76 : vector<8x128xf32>
    %78 = tpu.concatenate %65, %72 in 1 : vector<8x128xf32>, vector<8x128xf32> -> vector<8x256xf32>
    %c0_53 = arith.constant 0 : index
    %c0_54 = arith.constant 0 : index
    %79 = vector.load %arg4[%c0_53, %c0_54] : memref<256x128xf32, #tpu.memory_space<vmem>>, vector<256x128xf32>
    %cst_55 = arith.constant dense<0.000000e+00> : vector<8x128xf32>
    %80 = tpu.matmul %78, %79, %cst_55 {dimension_numbers = #tpu.dot_dimension_numbers<[1], [0], [0], [1], [0, 0, 1, 1], [], []>} : vector<8x256xf32>, vector<256x128xf32>, vector<8x128xf32> -> vector<8x128xf32>
    %c0_56 = arith.constant 0 : index
    %c0_57 = arith.constant 0 : index
    %81 = vector.load %arg5[%c0_56, %c0_57] : memref<1x128xf32, #tpu.memory_space<vmem>>, vector<1x128xf32>
    %82 = vector.broadcast %81 : vector<1x128xf32> to vector<8x128xf32>
    %83 = arith.addf %80, %82 : vector<8x128xf32>
    %84 = math.tanh %83 : vector<8x128xf32>
    %85 = vector.extract_strided_slice %5 {offsets = [56, 0], sizes = [8, 128], strides = [1, 1]} : vector<64x128xf32> to vector<8x128xf32>
    %c0_58 = arith.constant 0 : index
    %c0_59 = arith.constant 0 : index
    %86 = vector.load %arg2[%c0_58, %c0_59] : memref<128x128xf32, #tpu.memory_space<vmem>>, vector<128x128xf32>
    %cst_60 = arith.constant dense<0.000000e+00> : vector<8x128xf32>
    %87 = tpu.matmul %77, %86, %cst_60 {dimension_numbers = #tpu.dot_dimension_numbers<[1], [0], [0], [1], [0, 0, 1, 1], [], []>} : vector<8x128xf32>, vector<128x128xf32>, vector<8x128xf32> -> vector<8x128xf32>
    %88 = arith.addf %85, %87 : vector<8x128xf32>
    %89 = math.tanh %88 : vector<8x128xf32>
    %90 = tpu.concatenate %77, %84 in 1 : vector<8x128xf32>, vector<8x128xf32> -> vector<8x256xf32>
    %c0_61 = arith.constant 0 : index
    %c0_62 = arith.constant 0 : index
    %91 = vector.load %arg4[%c0_61, %c0_62] : memref<256x128xf32, #tpu.memory_space<vmem>>, vector<256x128xf32>
    %cst_63 = arith.constant dense<0.000000e+00> : vector<8x128xf32>
    %92 = tpu.matmul %90, %91, %cst_63 {dimension_numbers = #tpu.dot_dimension_numbers<[1], [0], [0], [1], [0, 0, 1, 1], [], []>} : vector<8x256xf32>, vector<256x128xf32>, vector<8x128xf32> -> vector<8x128xf32>
    %c0_64 = arith.constant 0 : index
    %c0_65 = arith.constant 0 : index
    %93 = vector.load %arg5[%c0_64, %c0_65] : memref<1x128xf32, #tpu.memory_space<vmem>>, vector<1x128xf32>
    %94 = vector.broadcast %93 : vector<1x128xf32> to vector<8x128xf32>
    %95 = arith.addf %92, %94 : vector<8x128xf32>
    %96 = math.tanh %95 : vector<8x128xf32>
    %97 = tpu.concatenate %89, %96 in 1 : vector<8x128xf32>, vector<8x128xf32> -> vector<8x256xf32>
    %c0_66 = arith.constant 0 : index
    %c0_67 = arith.constant 0 : index
    %98 = vector.load %arg4[%c0_66, %c0_67] : memref<256x128xf32, #tpu.memory_space<vmem>>, vector<256x128xf32>
    %cst_68 = arith.constant dense<0.000000e+00> : vector<8x128xf32>
    %99 = tpu.matmul %97, %98, %cst_68 {dimension_numbers = #tpu.dot_dimension_numbers<[1], [0], [0], [1], [0, 0, 1, 1], [], []>} : vector<8x256xf32>, vector<256x128xf32>, vector<8x128xf32> -> vector<8x128xf32>
    %c0_69 = arith.constant 0 : index
    %c0_70 = arith.constant 0 : index
    %100 = vector.load %arg5[%c0_69, %c0_70] : memref<1x128xf32, #tpu.memory_space<vmem>>, vector<1x128xf32>
    %101 = vector.broadcast %100 : vector<1x128xf32> to vector<8x128xf32>
    %102 = arith.addf %99, %101 : vector<8x128xf32>
    %103 = math.tanh %102 : vector<8x128xf32>
    %104 = tpu.concatenate %24, %36, %48, %60, %72, %84, %96, %103 in 0 : vector<8x128xf32>, vector<8x128xf32>, vector<8x128xf32>, vector<8x128xf32>, vector<8x128xf32>, vector<8x128xf32>, vector<8x128xf32>, vector<8x128xf32> -> vector<64x128xf32>
    %c0_71 = arith.constant 0 : index
    %c0_72 = arith.constant 0 : index
    %105 = vector.load %arg6[%c0_71, %c0_72] : memref<128x128xf32, #tpu.memory_space<vmem>>, vector<128x128xf32>
    %cst_73 = arith.constant dense<0.000000e+00> : vector<64x128xf32>
    %106 = tpu.matmul %104, %105, %cst_73 {dimension_numbers = #tpu.dot_dimension_numbers<[1], [0], [0], [1], [0, 0, 1, 1], [], []>} : vector<64x128xf32>, vector<128x128xf32>, vector<64x128xf32> -> vector<64x128xf32>
    %c0_74 = arith.constant 0 : index
    %c0_75 = arith.constant 0 : index
    %107 = vector.load %arg7[%c0_74, %c0_75] : memref<1x128xf32, #tpu.memory_space<vmem>>, vector<1x128xf32>
    %108 = vector.broadcast %107 : vector<1x128xf32> to vector<64x128xf32>
    %109 = arith.addf %106, %108 : vector<64x128xf32>
    %c0_76 = arith.constant 0 : index
    %c0_77 = arith.constant 0 : index
    %110 = vector.load %arg8[%c0_76, %c0_77] : memref<64x128xf32, #tpu.memory_space<vmem>>, vector<64x128xf32>
    tpu.vector_store %arg8[%c0_76, %c0_77], %109 {strides = array<i32>} : memref<64x128xf32, #tpu.memory_space<vmem>>, vector<64x128xf32>,
    return
  }
}

</mosaic_0001>

<llo_original>
// kernel: tpu_custom_call.1
$region0: #{tpu_custom_call.1}
  #allocation0 [shape = 'u32[]', space=smem, size = 0x4, offset = 0x4, fixed_abs, tag = 'smem constant byte address 0x4 - core index']
  #allocation1 [shape = 'u32[72,128]{1,0:T(1,128)}', space=vmem, size = 0x9000, scoped, tag = 'internal scratch']
  %s0 = inlined_call_operand.hbm [shape: f32[64,128], index: 0, kind: input, shape index: {}]
  %s1 = inlined_call_operand.hbm [shape: f32[128,128], index: 1, kind: input, shape index: {}]
  %s2 = inlined_call_operand.hbm [shape: f32[128,128], index: 2, kind: input, shape index: {}]
  %s3 = inlined_call_operand.vmem [shape: f32[1,128], index: 3, kind: input, shape index: {}]
  %s4 = inlined_call_operand.hbm [shape: f32[256,128], index: 4, kind: input, shape index: {}]
  %s5 = inlined_call_operand.vmem [shape: f32[1,128], index: 5, kind: input, shape index: {}]
  %s6 = inlined_call_operand.hbm [shape: f32[128,128], index: 6, kind: input, shape index: {}]
  %s7 = inlined_call_operand.vmem [shape: f32[1,128], index: 7, kind: input, shape index: {}]
  %s8 = inlined_call_operand.hbm [shape: f32[64,128], index: 8, kind: output, shape index: {}]
  %s9 = sld [smem:[#allocation0]]
  $region62: #{tpu_custom_call.1} parent=0
    _
  %s11 = ssub.s32 1, %s9
  %s12 = scalar_select 0, %s11, %s9
  $region1: #{tpu_custom_call.1} parent=0
    #allocation2 [shape = 'u8[32768]{0}', space=vmem, size = 0x8000, scoped, tag = 'input window, operand 0, single buffered']
    #allocation3 [shape = 's32[1]{0}', space=sflag, size = 0x4, scoped, tag = 'scoped memory for tpu_custom_call.1']
    #allocation4 [shape = 's32[1]{0}', space=sflag, size = 0x4, scoped, tag = 'scoped memory for tpu_custom_call.1']
    #allocation5 [shape = 'u8[65536]{0}', space=vmem, size = 0x10000, scoped, tag = 'input window, operand 1, single buffered']
    #allocation6 [shape = 's32[1]{0}', space=sflag, size = 0x4, scoped, tag = 'scoped memory for tpu_custom_call.1']
    #allocation7 [shape = 'u8[65536]{0}', space=vmem, size = 0x10000, scoped, tag = 'input window, operand 2, single buffered']
    #allocation8 [shape = 'u8[131072]{0}', space=vmem, size = 0x20000, scoped, tag = 'input window, operand 4, single buffered']
    #allocation9 [shape = 's32[1]{0}', space=sflag, size = 0x4, scoped, tag = 'scoped memory for tpu_custom_call.1']
    #allocation10 [shape = 'u8[65536]{0}', space=vmem, size = 0x10000, scoped, tag = 'input window, operand 6, single buffered']
    #allocation11 [shape = 'u8[32768]{0}', space=vmem, size = 0x8000, scoped, tag = 'output window, operand 0, single buffered']
    %13 = vsyncpa [#allocation3], 0
    %14 = vsyncpa [#allocation6], 0
    %15 = vsyncpa [#allocation9], 0
    %16 = vsyncpa [#allocation4], 0
    // Predicated region
    $region2: #{tpu_custom_call.1} parent=1 // pred_check
      _
    $region3: #{tpu_custom_call.1} parent=1 // pred_check_branch
      %18 = sbr.rel (0) target = $region5
    $region4: #{tpu_custom_call.1} parent=1 // pred_region
      %20 = vsyncadd [#allocation3], 0
      %s21 = sshll.u32 %s0, 4
      %s22 = int_to_ptr.hbm [resolvable:$true] %s21
      %s23 = sshll.u32 [#allocation2], 4
      %s24 = int_to_ptr.vmem [resolvable:$true] %s23
      %29 = dma.hbm_to_vmem [thread:$0]  %s22, 1024, %s24, [#allocation3], 128, 128, 8
    $region5: #{tpu_custom_call.1} parent=1 // pred_fallthru
      _
    // Predicated region
    $region6: #{tpu_custom_call.1} parent=1 // pred_check
      _
    $region7: #{tpu_custom_call.1} parent=1 // pred_check_branch
      %31 = sbr.rel (0) target = $region9
    $region8: #{tpu_custom_call.1} parent=1 // pred_region
      %33 = vsyncadd [#allocation6], 0
      %s34 = sshll.u32 %s1, 4
      %s35 = int_to_ptr.hbm [resolvable:$true] %s34
      %s36 = sshll.u32 [#allocation5], 4
      %s37 = int_to_ptr.vmem [resolvable:$true] %s36
      %42 = dma.hbm_to_vmem [thread:$0]  %s35, 2048, %s37, [#allocation6], 128, 128, 8
    $region9: #{tpu_custom_call.1} parent=1 // pred_fallthru
      _
    // Predicated region
    $region10: #{tpu_custom_call.1} parent=1 // pred_check
      _
    $region11: #{tpu_custom_call.1} parent=1 // pred_check_branch
      %44 = sbr.rel (0) target = $region13
    $region12: #{tpu_custom_call.1} parent=1 // pred_region
      %46 = vsyncadd [#allocation6], 0
      %s47 = sshll.u32 %s2, 4
      %s48 = int_to_ptr.hbm [resolvable:$true] %s47
      %s49 = sshll.u32 [#allocation7], 4
      %s50 = int_to_ptr.vmem [resolvable:$true] %s49
      %55 = dma.hbm_to_vmem [thread:$0]  %s48, 2048, %s50, [#allocation6], 128, 128, 8
    $region13: #{tpu_custom_call.1} parent=1 // pred_fallthru
      _
    // Predicated region
    $region14: #{tpu_custom_call.1} parent=1 // pred_check
      _
    $region15: #{tpu_custom_call.1} parent=1 // pred_check_branch
      %57 = sbr.rel (0) target = $region17
    $region16: #{tpu_custom_call.1} parent=1 // pred_region
      _
    $region17: #{tpu_custom_call.1} parent=1 // pred_fallthru
      _
    // Predicated region
    $region18: #{tpu_custom_call.1} parent=1 // pred_check
      _
    $region19: #{tpu_custom_call.1} parent=1 // pred_check_branch
      %59 = sbr.rel (0) target = $region21
    $region20: #{tpu_custom_call.1} parent=1 // pred_region
      %61 = vsyncadd [#allocation9], 0
      %s62 = sshll.u32 %s4, 4
      %s63 = int_to_ptr.hbm [resolvable:$true] %s62
      %s64 = sshll.u32 [#allocation8], 4
      %s65 = int_to_ptr.vmem [resolvable:$true] %s64
      %70 = dma.hbm_to_vmem [thread:$0]  %s63, 4096, %s65, [#allocation9], 128, 128, 8
    $region21: #{tpu_custom_call.1} parent=1 // pred_fallthru
      _
    // Predicated region
    $region22: #{tpu_custom_call.1} parent=1 // pred_check
      _
    $region23: #{tpu_custom_call.1} parent=1 // pred_check_branch
      %72 = sbr.rel (0) target = $region25
    $region24: #{tpu_custom_call.1} parent=1 // pred_region
      _
    $region25: #{tpu_custom_call.1} parent=1 // pred_fallthru
      _
    // Predicated region
    $region26: #{tpu_custom_call.1} parent=1 // pred_check
      _
    $region27: #{tpu_custom_call.1} parent=1 // pred_check_branch
      %74 = sbr.rel (0) target = $region29
    $region28: #{tpu_custom_call.1} parent=1 // pred_region
      %76 = vsyncadd [#allocation9], 0
      %s77 = sshll.u32 %s6, 4
      %s78 = int_to_ptr.hbm [resolvable:$true] %s77
      %s79 = sshll.u32 [#allocation10], 4
      %s80 = int_to_ptr.vmem [resolvable:$true] %s79
      %85 = dma.hbm_to_vmem [thread:$0]  %s78, 2048, %s80, [#allocation9], 128, 128, 8
    $region29: #{tpu_custom_call.1} parent=1 // pred_fallthru
      _
    // Predicated region
    $region30: #{tpu_custom_call.1} parent=1 // pred_check
      _
    $region31: #{tpu_custom_call.1} parent=1 // pred_check_branch
      %87 = sbr.rel (0) target = $region33
    $region32: #{tpu_custom_call.1} parent=1 // pred_region
      _
    $region33: #{tpu_custom_call.1} parent=1 // pred_fallthru
      _
    // Predicated region
    $region34: #{tpu_custom_call.1} parent=1 // pred_check
      _
    $region35: #{tpu_custom_call.1} parent=1 // pred_check_branch
      %89 = sbr.rel (0) target = $region37
    $region36: #{tpu_custom_call.1} parent=1 // pred_region
      %91 = dma.done [#allocation3], 1024
    $region37: #{tpu_custom_call.1} parent=1 // pred_fallthru
      _
    // Predicated region
    $region38: #{tpu_custom_call.1} parent=1 // pred_check
      _
    $region39: #{tpu_custom_call.1} parent=1 // pred_check_branch
      %93 = sbr.rel (0) target = $region41
    $region40: #{tpu_custom_call.1} parent=1 // pred_region
      %95 = dma.done [#allocation6], 2048
    $region41: #{tpu_custom_call.1} parent=1 // pred_fallthru
      _
    // Predicated region
    $region42: #{tpu_custom_call.1} parent=1 // pred_check
      _
    $region43: #{tpu_custom_call.1} parent=1 // pred_check_branch
      %97 = sbr.rel (0) target = $region45
    $region44: #{tpu_custom_call.1} parent=1 // pred_region
      %99 = dma.done [#allocation6], 2048
    $region45: #{tpu_custom_call.1} parent=1 // pred_fallthru
      _
    // Predicated region
    $region46: #{tpu_custom_call.1} parent=1 // pred_check
      _
    $region47: #{tpu_custom_call.1} parent=1 // pred_check_branch
      %101 = sbr.rel (0) target = $region49
    $region48: #{tpu_custom_call.1} parent=1 // pred_region
      %103 = dma.done [#allocation9], 4096
    $region49: #{tpu_custom_call.1} parent=1 // pred_fallthru
      _
    // Predicated region
    $region50: #{tpu_custom_call.1} parent=1 // pred_check
      _
    $region51: #{tpu_custom_call.1} parent=1 // pred_check_branch
      %105 = sbr.rel (0) target = $region53
    $region52: #{tpu_custom_call.1} parent=1 // pred_region
      %107 = dma.done [#allocation9], 2048
    $region53: #{tpu_custom_call.1} parent=1 // pred_fallthru
      _
    %v108 = vld [vmem:[#allocation2] sm:$0xff]
    %v109 = vld [vmem:[#allocation2 + $0x8] sm:$0xff]
    %v110 = vld [vmem:[#allocation2 + $0x10] sm:$0xff]
    %v111 = vld [vmem:[#allocation2 + $0x18] sm:$0xff]
    %v112 = vld [vmem:[#allocation2 + $0x20] sm:$0xff]
    %v113 = vld [vmem:[#allocation2 + $0x28] sm:$0xff]
    %v114 = vld [vmem:[#allocation2 + $0x30] sm:$0xff]
    %v115 = vld [vmem:[#allocation2 + $0x38] sm:$0xff]
    %v116 = vld [vmem:[#allocation5] sm:$0xff]
    %v117 = vld [vmem:[#allocation5 + $0x8] sm:$0xff]
    %v118 = vld [vmem:[#allocation5 + $0x10] sm:$0xff]
    %v119 = vld [vmem:[#allocation5 + $0x18] sm:$0xff]
    %v120 = vld [vmem:[#allocation5 + $0x20] sm:$0xff]
    %v121 = vld [vmem:[#allocation5 + $0x28] sm:$0xff]
    %v122 = vld [vmem:[#allocation5 + $0x30] sm:$0xff]
    %v123 = vld [vmem:[#allocation5 + $0x38] sm:$0xff]
    %v124 = vld [vmem:[#allocation5 + $0x40] sm:$0xff]
    %v125 = vld [vmem:[#allocation5 + $0x48] sm:$0xff]
    %v126 = vld [vmem:[#allocation5 + $0x50] sm:$0xff]
    %v127 = vld [vmem:[#allocation5 + $0x58] sm:$0xff]
    %v128 = vld [vmem:[#allocation5 + $0x60] sm:$0xff]
    %v129 = vld [vmem:[#allocation5 + $0x68] sm:$0xff]
    %v130 = vld [vmem:[#allocation5 + $0x70] sm:$0xff]
    %v131 = vld [vmem:[#allocation5 + $0x78] sm:$0xff]
    %v132 = vld [vmem:[%s3] sm:$0x1]
    %v134 = vperm.slane %v132, 0
    %136 = vmatpush.msra.mxu0 %v131
    %137 = vmatpush.msra.mxu0 %v130
    %138 = vmatpush.msra.mxu0 %v129
    %139 = vmatpush.msra.mxu0 %v128
    %140 = vmatpush.msra.mxu0 %v127
    %141 = vmatpush.msra.mxu0 %v126
    %142 = vmatpush.msra.mxu0 %v125
    %143 = vmatpush.msra.mxu0 %v124
    %144 = vmatpush.msra.mxu0 %v123
    %145 = vmatpush.msra.mxu0 %v122
    %146 = vmatpush.msra.mxu0 %v121
    %147 = vmatpush.msra.mxu0 %v120
    %148 = vmatpush.msra.mxu0 %v119
    %149 = vmatpush.msra.mxu0 %v118
    %150 = vmatpush.msra.mxu0 %v117
    %151 = vmatpush.msra.mxu0 %v116
    %152 = vmatmul.f32.gmra.mxu0 %v108
    %v153 = vpop.f32.mrf.mxu0
    %v154 = vadd.f32 %v134, %v153
    %155 = vmatmul.f32.gmra.mxu0 %v109
    %v156 = vpop.f32.mrf.mxu0
    %v157 = vadd.f32 %v134, %v156
    %158 = vmatmul.f32.gmra.mxu0 %v110
    %v159 = vpop.f32.mrf.mxu0
    %v160 = vadd.f32 %v134, %v159
    %161 = vmatmul.f32.gmra.mxu0 %v111
    %v162 = vpop.f32.mrf.mxu0
    %v163 = vadd.f32 %v134, %v162
    %164 = vmatmul.f32.gmra.mxu0 %v112
    %v165 = vpop.f32.mrf.mxu0
    %v166 = vadd.f32 %v134, %v165
    %167 = vmatmul.f32.gmra.mxu0 %v113
    %v168 = vpop.f32.mrf.mxu0
    %v169 = vadd.f32 %v134, %v168
    %170 = vmatmul.f32.gmra.mxu0 %v114
    %v171 = vpop.f32.mrf.mxu0
    %v172 = vadd.f32 %v134, %v171
    %173 = vmatmul.f32.gmra.mxu0 %v115
    %v174 = vpop.f32.mrf.mxu0
    %v175 = vadd.f32 %v134, %v174
    %176 = vdwg.mxu0
    %v177 = vld [vmem:[#allocation7] sm:$0xff]
    %v178 = vld [vmem:[#allocation7 + $0x8] sm:$0xff]
    %v179 = vld [vmem:[#allocation7 + $0x10] sm:$0xff]
    %v180 = vld [vmem:[#allocation7 + $0x18] sm:$0xff]
    %v181 = vld [vmem:[#allocation7 + $0x20] sm:$0xff]
    %v182 = vld [vmem:[#allocation7 + $0x28] sm:$0xff]
    %v183 = vld [vmem:[#allocation7 + $0x30] sm:$0xff]
    %v184 = vld [vmem:[#allocation7 + $0x38] sm:$0xff]
    %v185 = vld [vmem:[#allocation7 + $0x40] sm:$0xff]
    %v186 = vld [vmem:[#allocation7 + $0x48] sm:$0xff]
    %v187 = vld [vmem:[#allocation7 + $0x50] sm:$0xff]
    %v188 = vld [vmem:[#allocation7 + $0x58] sm:$0xff]
    %v189 = vld [vmem:[#allocation7 + $0x60] sm:$0xff]
    %v190 = vld [vmem:[#allocation7 + $0x68] sm:$0xff]
    %v191 = vld [vmem:[#allocation7 + $0x70] sm:$0xff]
    %v192 = vld [vmem:[#allocation7 + $0x78] sm:$0xff]
    %193 = vmatpush.msra.mxu0 %v192
    %194 = vmatpush.msra.mxu0 %v191
    %195 = vmatpush.msra.mxu0 %v190
    %196 = vmatpush.msra.mxu0 %v189
    %197 = vmatpush.msra.mxu0 %v188
    %198 = vmatpush.msra.mxu0 %v187
    %199 = vmatpush.msra.mxu0 %v186
    %200 = vmatpush.msra.mxu0 %v185
    %201 = vmatpush.msra.mxu0 %v184
    %202 = vmatpush.msra.mxu0 %v183
    %203 = vmatpush.msra.mxu0 %v182
    %204 = vmatpush.msra.mxu0 %v181
    %205 = vmatpush.msra.mxu0 %v180
    %206 = vmatpush.msra.mxu0 %v179
    %207 = vmatpush.msra.mxu0 %v178
    %208 = vmatpush.msra.mxu0 %v177
    %209 = vmatmul.f32.gmra.mxu0 0.0
    %v210 = vpop.f32.mrf.mxu0
    %v211 = vadd.f32 0.0, %v210
    %212 = vdwg.mxu0
    %v213 = vadd.f32 %v154, %v211
    %v214 = vtanh.pop %v213
    %215 = vmatpush.msra.mxu0 %v192
    %216 = vmatpush.msra.mxu0 %v191
    %217 = vmatpush.msra.mxu0 %v190
    %218 = vmatpush.msra.mxu0 %v189
    %219 = vmatpush.msra.mxu0 %v188
    %220 = vmatpush.msra.mxu0 %v187
    %221 = vmatpush.msra.mxu0 %v186
    %222 = vmatpush.msra.mxu0 %v185
    %223 = vmatpush.msra.mxu0 %v184
    %224 = vmatpush.msra.mxu0 %v183
    %225 = vmatpush.msra.mxu0 %v182
    %226 = vmatpush.msra.mxu0 %v181
    %227 = vmatpush.msra.mxu0 %v180
    %228 = vmatpush.msra.mxu0 %v179
    %229 = vmatpush.msra.mxu0 %v178
    %230 = vmatpush.msra.mxu0 %v177
    %231 = vmatmul.f32.gmra.mxu0 %v214
    %v232 = vpop.f32.mrf.mxu0
    %v233 = vadd.f32 0.0, %v232
    %234 = vdwg.mxu0
    %v235 = vadd.f32 %v157, %v233
    %v236 = vtanh.pop %v235
    %v237 = vld [vmem:[#allocation8] sm:$0xff]
    %v238 = vld [vmem:[#allocation8 + $0x8] sm:$0xff]
    %v239 = vld [vmem:[#allocation8 + $0x10] sm:$0xff]
    %v240 = vld [vmem:[#allocation8 + $0x18] sm:$0xff]
    %v241 = vld [vmem:[#allocation8 + $0x20] sm:$0xff]
    %v242 = vld [vmem:[#allocation8 + $0x28] sm:$0xff]
    %v243 = vld [vmem:[#allocation8 + $0x30] sm:$0xff]
    %v244 = vld [vmem:[#allocation8 + $0x38] sm:$0xff]
    %v245 = vld [vmem:[#allocation8 + $0x40] sm:$0xff]
    %v246 = vld [vmem:[#allocation8 + $0x48] sm:$0xff]
    %v247 = vld [vmem:[#allocation8 + $0x50] sm:$0xff]
    %v248 = vld [vmem:[#allocation8 + $0x58] sm:$0xff]
    %v249 = vld [vmem:[#allocation8 + $0x60] sm:$0xff]
    %v250 = vld [vmem:[#allocation8 + $0x68] sm:$0xff]
    %v251 = vld [vmem:[#allocation8 + $0x70] sm:$0xff]
    %v252 = vld [vmem:[#allocation8 + $0x78] sm:$0xff]
    %v253 = vld [vmem:[#allocation8 + $0x80] sm:$0xff]
    %v254 = vld [vmem:[#allocation8 + $0x88] sm:$0xff]
    %v255 = vld [vmem:[#allocation8 + $0x90] sm:$0xff]
    %v256 = vld [vmem:[#allocation8 + $0x98] sm:$0xff]
    %v257 = vld [vmem:[#allocation8 + $0xa0] sm:$0xff]
    %v258 = vld [vmem:[#allocation8 + $0xa8] sm:$0xff]
    %v259 = vld [vmem:[#allocation8 + $0xb0] sm:$0xff]
    %v260 = vld [vmem:[#allocation8 + $0xb8] sm:$0xff]
    %v261 = vld [vmem:[#allocation8 + $0xc0] sm:$0xff]
    %v262 = vld [vmem:[#allocation8 + $0xc8] sm:$0xff]
    %v263 = vld [vmem:[#allocation8 + $0xd0] sm:$0xff]
    %v264 = vld [vmem:[#allocation8 + $0xd8] sm:$0xff]
    %v265 = vld [vmem:[#allocation8 + $0xe0] sm:$0xff]
    %v266 = vld [vmem:[#allocation8 + $0xe8] sm:$0xff]
    %v267 = vld [vmem:[#allocation8 + $0xf0] sm:$0xff]
    %v268 = vld [vmem:[#allocation8 + $0xf8] sm:$0xff]
    %v269 = vld [vmem:[%s5] sm:$0x1]
    %v271 = vperm.slane %v269, 0
    %273 = vmatpush.msra.mxu0 %v252
    %274 = vmatpush.msra.mxu0 %v251
    %275 = vmatpush.msra.mxu0 %v250
    %276 = vmatpush.msra.mxu0 %v249
    %277 = vmatpush.msra.mxu0 %v248
    %278 = vmatpush.msra.mxu0 %v247
    %279 = vmatpush.msra.mxu0 %v246
    %280 = vmatpush.msra.mxu0 %v245
    %281 = vmatpush.msra.mxu0 %v244
    %282 = vmatpush.msra.mxu0 %v243
    %283 = vmatpush.msra.mxu0 %v242
    %284 = vmatpush.msra.mxu0 %v241
    %285 = vmatpush.msra.mxu0 %v240
    %286 = vmatpush.msra.mxu0 %v239
    %287 = vmatpush.msra.mxu0 %v238
    %288 = vmatpush.msra.mxu0 %v237
    %289 = vmatmul.f32.gmra.mxu0 %v214
    %v290 = vpop.f32.mrf.mxu0
    %v291 = vadd.f32 %v271, %v290
    %292 = vdwg.mxu0
    %293 = vmatpush.msra.mxu0 %v268
    %294 = vmatpush.msra.mxu0 %v267
    %295 = vmatpush.msra.mxu0 %v266
    %296 = vmatpush.msra.mxu0 %v265
    %297 = vmatpush.msra.mxu0 %v264
    %298 = vmatpush.msra.mxu0 %v263
    %299 = vmatpush.msra.mxu0 %v262
    %300 = vmatpush.msra.mxu0 %v261
    %301 = vmatpush.msra.mxu0 %v260
    %302 = vmatpush.msra.mxu0 %v259
    %303 = vmatpush.msra.mxu0 %v258
    %304 = vmatpush.msra.mxu0 %v257
    %305 = vmatpush.msra.mxu0 %v256
    %306 = vmatpush.msra.mxu0 %v255
    %307 = vmatpush.msra.mxu0 %v254
    %308 = vmatpush.msra.mxu0 %v253
    %309 = vmatmul.f32.gmra.mxu0 0.0
    %v310 = vpop.f32.mrf.mxu0
    %v311 = vadd.f32 %v291, %v310
    %312 = vdwg.mxu0
    %v313 = vtanh.pop %v311
    %314 = vmatpush.msra.mxu0 %v192
    %315 = vmatpush.msra.mxu0 %v191
    %316 = vmatpush.msra.mxu0 %v190
    %317 = vmatpush.msra.mxu0 %v189
    %318 = vmatpush.msra.mxu0 %v188
    %319 = vmatpush.msra.mxu0 %v187
    %320 = vmatpush.msra.mxu0 %v186
    %321 = vmatpush.msra.mxu0 %v185
    %322 = vmatpush.msra.mxu0 %v184
    %323 = vmatpush.msra.mxu0 %v183
    %324 = vmatpush.msra.mxu0 %v182
    %325 = vmatpush.msra.mxu0 %v181
    %326 = vmatpush.msra.mxu0 %v180
    %327 = vmatpush.msra.mxu0 %v179
    %328 = vmatpush.msra.mxu0 %v178
    %329 = vmatpush.msra.mxu0 %v177
    %330 = vmatmul.f32.gmra.mxu0 %v236
    %v331 = vpop.f32.mrf.mxu0
    %v332 = vadd.f32 0.0, %v331
    %333 = vdwg.mxu0
    %v334 = vadd.f32 %v160, %v332
    %v335 = vtanh.pop %v334
    %336 = vmatpush.msra.mxu0 %v252
    %337 = vmatpush.msra.mxu0 %v251
    %338 = vmatpush.msra.mxu0 %v250
    %339 = vmatpush.msra.mxu0 %v249
    %340 = vmatpush.msra.mxu0 %v248
    %341 = vmatpush.msra.mxu0 %v247
    %342 = vmatpush.msra.mxu0 %v246
    %343 = vmatpush.msra.mxu0 %v245
    %344 = vmatpush.msra.mxu0 %v244
    %345 = vmatpush.msra.mxu0 %v243
    %346 = vmatpush.msra.mxu0 %v242
    %347 = vmatpush.msra.mxu0 %v241
    %348 = vmatpush.msra.mxu0 %v240
    %349 = vmatpush.msra.mxu0 %v239
    %350 = vmatpush.msra.mxu0 %v238
    %351 = vmatpush.msra.mxu0 %v237
    %352 = vmatmul.f32.gmra.mxu0 %v236
    %v353 = vpop.f32.mrf.mxu0
    %v354 = vadd.f32 %v271, %v353
    %355 = vdwg.mxu0
    %356 = vmatpush.msra.mxu0 %v268
    %357 = vmatpush.msra.mxu0 %v267
    %358 = vmatpush.msra.mxu0 %v266
    %359 = vmatpush.msra.mxu0 %v265
    %360 = vmatpush.msra.mxu0 %v264
    %361 = vmatpush.msra.mxu0 %v263
    %362 = vmatpush.msra.mxu0 %v262
    %363 = vmatpush.msra.mxu0 %v261
    %364 = vmatpush.msra.mxu0 %v260
    %365 = vmatpush.msra.mxu0 %v259
    %366 = vmatpush.msra.mxu0 %v258
    %367 = vmatpush.msra.mxu0 %v257
    %368 = vmatpush.msra.mxu0 %v256
    %369 = vmatpush.msra.mxu0 %v255
    %370 = vmatpush.msra.mxu0 %v254
    %371 = vmatpush.msra.mxu0 %v253
    %372 = vmatmul.f32.gmra.mxu0 %v313
    %v373 = vpop.f32.mrf.mxu0
    %v374 = vadd.f32 %v354, %v373
    %375 = vdwg.mxu0
    %v376 = vtanh.pop %v374
    %377 = vmatpush.msra.mxu0 %v192
    %378 = vmatpush.msra.mxu0 %v191
    %379 = vmatpush.msra.mxu0 %v190
    %380 = vmatpush.msra.mxu0 %v189
    %381 = vmatpush.msra.mxu0 %v188
    %382 = vmatpush.msra.mxu0 %v187
    %383 = vmatpush.msra.mxu0 %v186
    %384 = vmatpush.msra.mxu0 %v185
    %385 = vmatpush.msra.mxu0 %v184
    %386 = vmatpush.msra.mxu0 %v183
    %387 = vmatpush.msra.mxu0 %v182
    %388 = vmatpush.msra.mxu0 %v181
    %389 = vmatpush.msra.mxu0 %v180
    %390 = vmatpush.msra.mxu0 %v179
    %391 = vmatpush.msra.mxu0 %v178
    %392 = vmatpush.msra.mxu0 %v177
    %393 = vmatmul.f32.gmra.mxu0 %v335
    %v394 = vpop.f32.mrf.mxu0
    %v395 = vadd.f32 0.0, %v394
    %396 = vdwg.mxu0
    %v397 = vadd.f32 %v163, %v395
    %v398 = vtanh.pop %v397
    %399 = vmatpush.msra.mxu0 %v252
    %400 = vmatpush.msra.mxu0 %v251
    %401 = vmatpush.msra.mxu0 %v250
    %402 = vmatpush.msra.mxu0 %v249
    %403 = vmatpush.msra.mxu0 %v248
    %404 = vmatpush.msra.mxu0 %v247
    %405 = vmatpush.msra.mxu0 %v246
    %406 = vmatpush.msra.mxu0 %v245
    %407 = vmatpush.msra.mxu0 %v244
    %408 = vmatpush.msra.mxu0 %v243
    %409 = vmatpush.msra.mxu0 %v242
    %410 = vmatpush.msra.mxu0 %v241
    %411 = vmatpush.msra.mxu0 %v240
    %412 = vmatpush.msra.mxu0 %v239
    %413 = vmatpush.msra.mxu0 %v238
    %414 = vmatpush.msra.mxu0 %v237
    %415 = vmatmul.f32.gmra.mxu0 %v335
    %v416 = vpop.f32.mrf.mxu0
    %v417 = vadd.f32 %v271, %v416
    %418 = vdwg.mxu0
    %419 = vmatpush.msra.mxu0 %v268
    %420 = vmatpush.msra.mxu0 %v267
    %421 = vmatpush.msra.mxu0 %v266
    %422 = vmatpush.msra.mxu0 %v265
    %423 = vmatpush.msra.mxu0 %v264
    %424 = vmatpush.msra.mxu0 %v263
    %425 = vmatpush.msra.mxu0 %v262
    %426 = vmatpush.msra.mxu0 %v261
    %427 = vmatpush.msra.mxu0 %v260
    %428 = vmatpush.msra.mxu0 %v259
    %429 = vmatpush.msra.mxu0 %v258
    %430 = vmatpush.msra.mxu0 %v257
    %431 = vmatpush.msra.mxu0 %v256
    %432 = vmatpush.msra.mxu0 %v255
    %433 = vmatpush.msra.mxu0 %v254
    %434 = vmatpush.msra.mxu0 %v253
    %435 = vmatmul.f32.gmra.mxu0 %v376
    %v436 = vpop.f32.mrf.mxu0
    %v437 = vadd.f32 %v417, %v436
    %438 = vdwg.mxu0
    %v439 = vtanh.pop %v437
    %440 = vmatpush.msra.mxu0 %v192
    %441 = vmatpush.msra.mxu0 %v191
    %442 = vmatpush.msra.mxu0 %v190
    %443 = vmatpush.msra.mxu0 %v189
    %444 = vmatpush.msra.mxu0 %v188
    %445 = vmatpush.msra.mxu0 %v187
    %446 = vmatpush.msra.mxu0 %v186
    %447 = vmatpush.msra.mxu0 %v185
    %448 = vmatpush.msra.mxu0 %v184
    %449 = vmatpush.msra.mxu0 %v183
    %450 = vmatpush.msra.mxu0 %v182
    %451 = vmatpush.msra.mxu0 %v181
    %452 = vmatpush.msra.mxu0 %v180
    %453 = vmatpush.msra.mxu0 %v179
    %454 = vmatpush.msra.mxu0 %v178
    %455 = vmatpush.msra.mxu0 %v177
    %456 = vmatmul.f32.gmra.mxu0 %v398
    %v457 = vpop.f32.mrf.mxu0
    %v458 = vadd.f32 0.0, %v457
    %459 = vdwg.mxu0
    %v460 = vadd.f32 %v166, %v458
    %v461 = vtanh.pop %v460
    %462 = vmatpush.msra.mxu0 %v252
    %463 = vmatpush.msra.mxu0 %v251
    %464 = vmatpush.msra.mxu0 %v250
    %465 = vmatpush.msra.mxu0 %v249
    %466 = vmatpush.msra.mxu0 %v248
    %467 = vmatpush.msra.mxu0 %v247
    %468 = vmatpush.msra.mxu0 %v246
    %469 = vmatpush.msra.mxu0 %v245
    %470 = vmatpush.msra.mxu0 %v244
    %471 = vmatpush.msra.mxu0 %v243
    %472 = vmatpush.msra.mxu0 %v242
    %473 = vmatpush.msra.mxu0 %v241
    %474 = vmatpush.msra.mxu0 %v240
    %475 = vmatpush.msra.mxu0 %v239
    %476 = vmatpush.msra.mxu0 %v238
    %477 = vmatpush.msra.mxu0 %v237
    %478 = vmatmul.f32.gmra.mxu0 %v398
    %v479 = vpop.f32.mrf.mxu0
    %v480 = vadd.f32 %v271, %v479
    %481 = vdwg.mxu0
    %482 = vmatpush.msra.mxu0 %v268
    %483 = vmatpush.msra.mxu0 %v267
    %484 = vmatpush.msra.mxu0 %v266
    %485 = vmatpush.msra.mxu0 %v265
    %486 = vmatpush.msra.mxu0 %v264
    %487 = vmatpush.msra.mxu0 %v263
    %488 = vmatpush.msra.mxu0 %v262
    %489 = vmatpush.msra.mxu0 %v261
    %490 = vmatpush.msra.mxu0 %v260
    %491 = vmatpush.msra.mxu0 %v259
    %492 = vmatpush.msra.mxu0 %v258
    %493 = vmatpush.msra.mxu0 %v257
    %494 = vmatpush.msra.mxu0 %v256
    %495 = vmatpush.msra.mxu0 %v255
    %496 = vmatpush.msra.mxu0 %v254
    %497 = vmatpush.msra.mxu0 %v253
    %498 = vmatmul.f32.gmra.mxu0 %v439
    %v499 = vpop.f32.mrf.mxu0
    %v500 = vadd.f32 %v480, %v499
    %501 = vdwg.mxu0
    %v502 = vtanh.pop %v500
    %503 = vmatpush.msra.mxu0 %v192
    %504 = vmatpush.msra.mxu0 %v191
    %505 = vmatpush.msra.mxu0 %v190
    %506 = vmatpush.msra.mxu0 %v189
    %507 = vmatpush.msra.mxu0 %v188
    %508 = vmatpush.msra.mxu0 %v187
    %509 = vmatpush.msra.mxu0 %v186
    %510 = vmatpush.msra.mxu0 %v185
    %511 = vmatpush.msra.mxu0 %v184
    %512 = vmatpush.msra.mxu0 %v183
    %513 = vmatpush.msra.mxu0 %v182
    %514 = vmatpush.msra.mxu0 %v181
    %515 = vmatpush.msra.mxu0 %v180
    %516 = vmatpush.msra.mxu0 %v179
    %517 = vmatpush.msra.mxu0 %v178
    %518 = vmatpush.msra.mxu0 %v177
    %519 = vmatmul.f32.gmra.mxu0 %v461
    %v520 = vpop.f32.mrf.mxu0
    %v521 = vadd.f32 0.0, %v520
    %522 = vdwg.mxu0
    %v523 = vadd.f32 %v169, %v521
    %v524 = vtanh.pop %v523
    %525 = vmatpush.msra.mxu0 %v252
    %526 = vmatpush.msra.mxu0 %v251
    %527 = vmatpush.msra.mxu0 %v250
    %528 = vmatpush.msra.mxu0 %v249
    %529 = vmatpush.msra.mxu0 %v248
    %530 = vmatpush.msra.mxu0 %v247
    %531 = vmatpush.msra.mxu0 %v246
    %532 = vmatpush.msra.mxu0 %v245
    %533 = vmatpush.msra.mxu0 %v244
    %534 = vmatpush.msra.mxu0 %v243
    %535 = vmatpush.msra.mxu0 %v242
    %536 = vmatpush.msra.mxu0 %v241
    %537 = vmatpush.msra.mxu0 %v240
    %538 = vmatpush.msra.mxu0 %v239
    %539 = vmatpush.msra.mxu0 %v238
    %540 = vmatpush.msra.mxu0 %v237
    %541 = vmatmul.f32.gmra.mxu0 %v461
    %v542 = vpop.f32.mrf.mxu0
    %v543 = vadd.f32 %v271, %v542
    %544 = vdwg.mxu0
    %545 = vmatpush.msra.mxu0 %v268
    %546 = vmatpush.msra.mxu0 %v267
    %547 = vmatpush.msra.mxu0 %v266
    %548 = vmatpush.msra.mxu0 %v265
    %549 = vmatpush.msra.mxu0 %v264
    %550 = vmatpush.msra.mxu0 %v263
    %551 = vmatpush.msra.mxu0 %v262
    %552 = vmatpush.msra.mxu0 %v261
    %553 = vmatpush.msra.mxu0 %v260
    %554 = vmatpush.msra.mxu0 %v259
    %555 = vmatpush.msra.mxu0 %v258
    %556 = vmatpush.msra.mxu0 %v257
    %557 = vmatpush.msra.mxu0 %v256
    %558 = vmatpush.msra.mxu0 %v255
    %559 = vmatpush.msra.mxu0 %v254
    %560 = vmatpush.msra.mxu0 %v253
    %561 = vmatmul.f32.gmra.mxu0 %v502
    %v562 = vpop.f32.mrf.mxu0
    %v563 = vadd.f32 %v543, %v562
    %564 = vdwg.mxu0
    %v565 = vtanh.pop %v563
    %566 = vmatpush.msra.mxu0 %v192
    %567 = vmatpush.msra.mxu0 %v191
    %568 = vmatpush.msra.mxu0 %v190
    %569 = vmatpush.msra.mxu0 %v189
    %570 = vmatpush.msra.mxu0 %v188
    %571 = vmatpush.msra.mxu0 %v187
    %572 = vmatpush.msra.mxu0 %v186
    %573 = vmatpush.msra.mxu0 %v185
    %574 = vmatpush.msra.mxu0 %v184
    %575 = vmatpush.msra.mxu0 %v183
    %576 = vmatpush.msra.mxu0 %v182
    %577 = vmatpush.msra.mxu0 %v181
    %578 = vmatpush.msra.mxu0 %v180
    %579 = vmatpush.msra.mxu0 %v179
    %580 = vmatpush.msra.mxu0 %v178
    %581 = vmatpush.msra.mxu0 %v177
    %582 = vmatmul.f32.gmra.mxu0 %v524
    %v583 = vpop.f32.mrf.mxu0
    %v584 = vadd.f32 0.0, %v583
    %585 = vdwg.mxu0
    %v586 = vadd.f32 %v172, %v584
    %v587 = vtanh.pop %v586
    %588 = vmatpush.msra.mxu0 %v252
    %589 = vmatpush.msra.mxu0 %v251
    %590 = vmatpush.msra.mxu0 %v250
    %591 = vmatpush.msra.mxu0 %v249
    %592 = vmatpush.msra.mxu0 %v248
    %593 = vmatpush.msra.mxu0 %v247
    %594 = vmatpush.msra.mxu0 %v246
    %595 = vmatpush.msra.mxu0 %v245
    %596 = vmatpush.msra.mxu0 %v244
    %597 = vmatpush.msra.mxu0 %v243
    %598 = vmatpush.msra.mxu0 %v242
    %599 = vmatpush.msra.mxu0 %v241
    %600 = vmatpush.msra.mxu0 %v240
    %601 = vmatpush.msra.mxu0 %v239
    %602 = vmatpush.msra.mxu0 %v238
    %603 = vmatpush.msra.mxu0 %v237
    %604 = vmatmul.f32.gmra.mxu0 %v524
    %v605 = vpop.f32.mrf.mxu0
    %v606 = vadd.f32 %v271, %v605
    %607 = vdwg.mxu0
    %608 = vmatpush.msra.mxu0 %v268
    %609 = vmatpush.msra.mxu0 %v267
    %610 = vmatpush.msra.mxu0 %v266
    %611 = vmatpush.msra.mxu0 %v265
    %612 = vmatpush.msra.mxu0 %v264
    %613 = vmatpush.msra.mxu0 %v263
    %614 = vmatpush.msra.mxu0 %v262
    %615 = vmatpush.msra.mxu0 %v261
    %616 = vmatpush.msra.mxu0 %v260
    %617 = vmatpush.msra.mxu0 %v259
    %618 = vmatpush.msra.mxu0 %v258
    %619 = vmatpush.msra.mxu0 %v257
    %620 = vmatpush.msra.mxu0 %v256
    %621 = vmatpush.msra.mxu0 %v255
    %622 = vmatpush.msra.mxu0 %v254
    %623 = vmatpush.msra.mxu0 %v253
    %624 = vmatmul.f32.gmra.mxu0 %v565
    %v625 = vpop.f32.mrf.mxu0
    %v626 = vadd.f32 %v606, %v625
    %627 = vdwg.mxu0
    %v628 = vtanh.pop %v626
    %629 = vmatpush.msra.mxu0 %v192
    %630 = vmatpush.msra.mxu0 %v191
    %631 = vmatpush.msra.mxu0 %v190
    %632 = vmatpush.msra.mxu0 %v189
    %633 = vmatpush.msra.mxu0 %v188
    %634 = vmatpush.msra.mxu0 %v187
    %635 = vmatpush.msra.mxu0 %v186
    %636 = vmatpush.msra.mxu0 %v185
    %637 = vmatpush.msra.mxu0 %v184
    %638 = vmatpush.msra.mxu0 %v183
    %639 = vmatpush.msra.mxu0 %v182
    %640 = vmatpush.msra.mxu0 %v181
    %641 = vmatpush.msra.mxu0 %v180
    %642 = vmatpush.msra.mxu0 %v179
    %643 = vmatpush.msra.mxu0 %v178
    %644 = vmatpush.msra.mxu0 %v177
    %645 = vmatmul.f32.gmra.mxu0 %v587
    %v646 = vpop.f32.mrf.mxu0
    %v647 = vadd.f32 0.0, %v646
    %648 = vdwg.mxu0
    %v649 = vadd.f32 %v175, %v647
    %v650 = vtanh.pop %v649
    %651 = vmatpush.msra.mxu0 %v252
    %652 = vmatpush.msra.mxu0 %v251
    %653 = vmatpush.msra.mxu0 %v250
    %654 = vmatpush.msra.mxu0 %v249
    %655 = vmatpush.msra.mxu0 %v248
    %656 = vmatpush.msra.mxu0 %v247
    %657 = vmatpush.msra.mxu0 %v246
    %658 = vmatpush.msra.mxu0 %v245
    %659 = vmatpush.msra.mxu0 %v244
    %660 = vmatpush.msra.mxu0 %v243
    %661 = vmatpush.msra.mxu0 %v242
    %662 = vmatpush.msra.mxu0 %v241
    %663 = vmatpush.msra.mxu0 %v240
    %664 = vmatpush.msra.mxu0 %v239
    %665 = vmatpush.msra.mxu0 %v238
    %666 = vmatpush.msra.mxu0 %v237
    %667 = vmatmul.f32.gmra.mxu0 %v587
    %v668 = vpop.f32.mrf.mxu0
    %v669 = vadd.f32 %v271, %v668
    %670 = vdwg.mxu0
    %671 = vmatpush.msra.mxu0 %v268
    %672 = vmatpush.msra.mxu0 %v267
    %673 = vmatpush.msra.mxu0 %v266
    %674 = vmatpush.msra.mxu0 %v265
    %675 = vmatpush.msra.mxu0 %v264
    %676 = vmatpush.msra.mxu0 %v263
    %677 = vmatpush.msra.mxu0 %v262
    %678 = vmatpush.msra.mxu0 %v261
    %679 = vmatpush.msra.mxu0 %v260
    %680 = vmatpush.msra.mxu0 %v259
    %681 = vmatpush.msra.mxu0 %v258
    %682 = vmatpush.msra.mxu0 %v257
    %683 = vmatpush.msra.mxu0 %v256
    %684 = vmatpush.msra.mxu0 %v255
    %685 = vmatpush.msra.mxu0 %v254
    %686 = vmatpush.msra.mxu0 %v253
    %687 = vmatmul.f32.gmra.mxu0 %v628
    %v688 = vpop.f32.mrf.mxu0
    %v689 = vadd.f32 %v669, %v688
    %690 = vdwg.mxu0
    %v691 = vtanh.pop %v689
    %692 = vmatpush.msra.mxu0 %v252
    %693 = vmatpush.msra.mxu0 %v251
    %694 = vmatpush.msra.mxu0 %v250
    %695 = vmatpush.msra.mxu0 %v249
    %696 = vmatpush.msra.mxu0 %v248
    %697 = vmatpush.msra.mxu0 %v247
    %698 = vmatpush.msra.mxu0 %v246
    %699 = vmatpush.msra.mxu0 %v245
    %700 = vmatpush.msra.mxu0 %v244
    %701 = vmatpush.msra.mxu0 %v243
    %702 = vmatpush.msra.mxu0 %v242
    %703 = vmatpush.msra.mxu0 %v241
    %704 = vmatpush.msra.mxu0 %v240
    %705 = vmatpush.msra.mxu0 %v239
    %706 = vmatpush.msra.mxu0 %v238
    %707 = vmatpush.msra.mxu0 %v237
    %708 = vmatmul.f32.gmra.mxu0 %v650
    %v709 = vpop.f32.mrf.mxu0
    %v710 = vadd.f32 %v271, %v709
    %711 = vdwg.mxu0
    %712 = vmatpush.msra.mxu0 %v268
    %713 = vmatpush.msra.mxu0 %v267
    %714 = vmatpush.msra.mxu0 %v266
    %715 = vmatpush.msra.mxu0 %v265
    %716 = vmatpush.msra.mxu0 %v264
    %717 = vmatpush.msra.mxu0 %v263
    %718 = vmatpush.msra.mxu0 %v262
    %719 = vmatpush.msra.mxu0 %v261
    %720 = vmatpush.msra.mxu0 %v260
    %721 = vmatpush.msra.mxu0 %v259
    %722 = vmatpush.msra.mxu0 %v258
    %723 = vmatpush.msra.mxu0 %v257
    %724 = vmatpush.msra.mxu0 %v256
    %725 = vmatpush.msra.mxu0 %v255
    %726 = vmatpush.msra.mxu0 %v254
    %727 = vmatpush.msra.mxu0 %v253
    %728 = vmatmul.f32.gmra.mxu0 %v691
    %v729 = vpop.f32.mrf.mxu0
    %v730 = vadd.f32 %v710, %v729
    %731 = vdwg.mxu0
    %v732 = vtanh.pop %v730
    %v733 = vld [vmem:[#allocation10] sm:$0xff]
    %v734 = vld [vmem:[#allocation10 + $0x8] sm:$0xff]
    %v735 = vld [vmem:[#allocation10 + $0x10] sm:$0xff]
    %v736 = vld [vmem:[#allocation10 + $0x18] sm:$0xff]
    %v737 = vld [vmem:[#allocation10 + $0x20] sm:$0xff]
    %v738 = vld [vmem:[#allocation10 + $0x28] sm:$0xff]
    %v739 = vld [vmem:[#allocation10 + $0x30] sm:$0xff]
    %v740 = vld [vmem:[#allocation10 + $0x38] sm:$0xff]
    %v741 = vld [vmem:[#allocation10 + $0x40] sm:$0xff]
    %v742 = vld [vmem:[#allocation10 + $0x48] sm:$0xff]
    %v743 = vld [vmem:[#allocation10 + $0x50] sm:$0xff]
    %v744 = vld [vmem:[#allocation10 + $0x58] sm:$0xff]
    %v745 = vld [vmem:[#allocation10 + $0x60] sm:$0xff]
    %v746 = vld [vmem:[#allocation10 + $0x68] sm:$0xff]
    %v747 = vld [vmem:[#allocation10 + $0x70] sm:$0xff]
    %v748 = vld [vmem:[#allocation10 + $0x78] sm:$0xff]
    %v749 = vld [vmem:[%s7] sm:$0x1]
    %v751 = vperm.slane %v749, 0
    %753 = vmatpush.msra.mxu0 %v748
    %754 = vmatpush.msra.mxu0 %v747
    %755 = vmatpush.msra.mxu0 %v746
    %756 = vmatpush.msra.mxu0 %v745
    %757 = vmatpush.msra.mxu0 %v744
    %758 = vmatpush.msra.mxu0 %v743
    %759 = vmatpush.msra.mxu0 %v742
    %760 = vmatpush.msra.mxu0 %v741
    %761 = vmatpush.msra.mxu0 %v740
    %762 = vmatpush.msra.mxu0 %v739
    %763 = vmatpush.msra.mxu0 %v738
    %764 = vmatpush.msra.mxu0 %v737
    %765 = vmatpush.msra.mxu0 %v736
    %766 = vmatpush.msra.mxu0 %v735
    %767 = vmatpush.msra.mxu0 %v734
    %768 = vmatpush.msra.mxu0 %v733
    %769 = vmatmul.f32.gmra.mxu0 %v313
    %v770 = vpop.f32.mrf.mxu0
    %v771 = vadd.f32 %v751, %v770
    %772 = vmatmul.f32.gmra.mxu0 %v376
    %v773 = vpop.f32.mrf.mxu0
    %v774 = vadd.f32 %v751, %v773
    %775 = vmatmul.f32.gmra.mxu0 %v439
    %v776 = vpop.f32.mrf.mxu0
    %v777 = vadd.f32 %v751, %v776
    %778 = vmatmul.f32.gmra.mxu0 %v502
    %v779 = vpop.f32.mrf.mxu0
    %v780 = vadd.f32 %v751, %v779
    %781 = vmatmul.f32.gmra.mxu0 %v565
    %v782 = vpop.f32.mrf.mxu0
    %v783 = vadd.f32 %v751, %v782
    %784 = vmatmul.f32.gmra.mxu0 %v628
    %v785 = vpop.f32.mrf.mxu0
    %v786 = vadd.f32 %v751, %v785
    %787 = vmatmul.f32.gmra.mxu0 %v691
    %v788 = vpop.f32.mrf.mxu0
    %v789 = vadd.f32 %v751, %v788
    %790 = vmatmul.f32.gmra.mxu0 %v732
    %v791 = vpop.f32.mrf.mxu0
    %v792 = vadd.f32 %v751, %v791
    %793 = vdwg.mxu0
    %794 = vst [vmem:[#allocation11] sm:$0xff] %v771
    %795 = vst [vmem:[#allocation11 + $0x8] sm:$0xff] %v774
    %796 = vst [vmem:[#allocation11 + $0x10] sm:$0xff] %v777
    %797 = vst [vmem:[#allocation11 + $0x18] sm:$0xff] %v780
    %798 = vst [vmem:[#allocation11 + $0x20] sm:$0xff] %v783
    %799 = vst [vmem:[#allocation11 + $0x28] sm:$0xff] %v786
    %800 = vst [vmem:[#allocation11 + $0x30] sm:$0xff] %v789
    %801 = vst [vmem:[#allocation11 + $0x38] sm:$0xff] %v792
    // Predicated region
    $region54: #{tpu_custom_call.1} parent=1 // pred_check
      _
    $region55: #{tpu_custom_call.1} parent=1 // pred_check_branch
      %803 = sbr.rel (0) target = $region57
    $region56: #{tpu_custom_call.1} parent=1 // pred_region
      %805 = vsyncadd [#allocation4], 0
      %s806 = sshll.u32 [#allocation11], 4
      %s807 = int_to_ptr.vmem [resolvable:$true] %s806
      %s808 = sshll.u32 %s8, 4
      %s809 = int_to_ptr.hbm [resolvable:$true] %s808
      %814 = dma.vmem_to_hbm [thread:$0]  %s807, 1024, %s809, [#allocation4], 128, 128, 8
    $region57: #{tpu_custom_call.1} parent=1 // pred_fallthru
      _
    // Predicated region
    $region58: #{tpu_custom_call.1} parent=1 // pred_check
      _
    $region59: #{tpu_custom_call.1} parent=1 // pred_check_branch
      %816 = sbr.rel (0) target = $region61
    $region60: #{tpu_custom_call.1} parent=1 // pred_region
      %818 = dma.done [#allocation4], 1024
    $region61: #{tpu_custom_call.1} parent=1 // pred_fallthru
      _
    %819 = vsyncpa [#allocation3], 1
    %820 = vsyncpa [#allocation6], 1
    %821 = vsyncpa [#allocation9], 1
    %822 = vsyncpa [#allocation4], 1

</llo_original>
